<compile_context>
chip_gen: v6e
topology: v6e:2x2x1
jax: 0.10.0
libtpu: 0.0.40
codegen_flags: <defaults>
</compile_context>

<pallas_src>
import functools

import jax
import jax.numpy as jnp
from jax.experimental import pallas as pl
from jax.experimental.pallas import tpu as pltpu

EPS = 1e-5  # torch.nn.InstanceNorm2d default


# ---------------------------------------------------------------------------
# Kernel
# ---------------------------------------------------------------------------
def resnet_layer_kernel(xpad_ref, w_ref, xres_ref, mask_ref, o_ref, xs_ref,
                        *, H, W, C, TC, QW):
    # xpad_ref: (C, L)      bf16  reflect-padded activation, row-major (Hp*Wp) + lane pad
    # w_ref   : (TC, 9*C)   bf16  packed weights, K index k = (kh*3+kw)*C + cin
    # xres_ref: (TC, QW)    f32   lane-dense residual (original-precision activation)
    # mask_ref: (1, QW)     f32   1.0 on valid output columns (q = i*Wp + j with j < W)
    # o_ref   : (TC, QW)    f32   residual + InstanceNorm(conv), lane-dense flat layout
    # xs_ref  : (9*C, QW)   bf16  persistent scratch: stacked lane-shifted conv operand
    Wp = W + 2
    inv_hw = 1.0 / float(H * W)

    # Stage the stacked, lane-shifted operand ONCE per batch image.  The slab block
    # only changes with the batch index, and the channel-tile grid axis is marked
    # "arbitrary", so this scratch stays valid for every output-channel tile.
    @pl.when(pl.program_id(1) == 0)
    def _():
        for kh in range(3):
            for kw in range(3):
                t = kh * 3 + kw
                s = kh * Wp + kw                      # static lane shift into the padded image
                xs_ref[t * C:(t + 1) * C, :] = xpad_ref[:, s:s + QW]

    # 3x3 conv == one K = 9*C MXU contraction, f32 accumulation.
    acc = jnp.dot(w_ref[...], xs_ref[...], preferred_element_type=jnp.float32)

    # InstanceNorm2d(affine=False): biased mean/var over the H*W valid columns.
    # Two-pass (subtract-mean) variance avoids E[x^2]-E[x]^2 cancellation.
    # Conv bias is omitted on purpose: a per-channel constant cancels exactly here.
    m = mask_ref[...]                                 # (1, QW)
    mean = jnp.sum(acc * m, axis=1, keepdims=True) * inv_hw
    cen = (acc - mean) * m
    var = jnp.sum(cen * cen, axis=1, keepdims=True) * inv_hw
    y = (acc - mean) * jax.lax.rsqrt(var + EPS)

    # Residual stays f32 and arrives lane-dense (aligned load, no reformat).
    o_ref[...] = (xres_ref[...] + y).astype(o_ref.dtype)


# ---------------------------------------------------------------------------
# Wrapper helpers
# ---------------------------------------------------------------------------
def _round_up(x, m):
    return (x + m - 1) // m * m


def _pick_channel_tile(c, target=256):
    if c <= target:
        return c
    for t in range(target, 7, -1):
        if c % t == 0 and t % 8 == 0:
            return t
    return c  # fall back to full-C tile (may need spatial tiling for huge C)


def _vmem_cap_bytes():
    # Generation-aware clamp: ~3/4 of physical VMEM (48 MiB on v7x, 96 MiB on v5e/v6e).
    try:
        info = pltpu.get_tpu_info()
        cap = getattr(info, "vmem_capacity_bytes", None)
        if cap:
            return int(cap) * 3 // 4
    except Exception:
        pass
    return 96 * 1024 * 1024


def _vmem_limit_bytes(C, tc, L, QW):
    slab = C * L * 2                     # bf16 padded slab (double-buffered by pipeline)
    w = tc * 9 * C * 2                   # bf16 weight tile
    xres = tc * QW * 4                   # f32 residual tile
    outb = tc * QW * 4                   # f32 output tile
    mask = QW * 4
    scratch = 9 * C * QW * 2             # persistent stacked bf16 operand
    work = 3 * tc * QW * 4 + 2 * C * QW * 2   # acc / centered / y + staging slice temps
    est = 2 * (slab + w + xres + outb + mask) + scratch + work
    return int(min(max(est * 3 // 2, 8 * 1024 * 1024), _vmem_cap_bytes()))


def _flat_from_nchw(x, QW):
    """NCHW f32 -> lane-dense flat (N, C, QW), column q = i*Wp + j (junk at j >= W)."""
    N, C, H, W = x.shape
    Wp = W + 2
    HWp = H * Wp
    xf = jnp.pad(x, ((0, 0), (0, 0), (0, 0), (0, 2))).reshape(N, C, HWp)
    if QW >= HWp:
        return jnp.pad(xf, ((0, 0), (0, 0), (0, QW - HWp)))
    return xf[..., :QW]


def _nchw_from_flat(x_flat, H, W):
    """Lane-dense flat (N, C, QW) -> NCHW (valid columns only)."""
    N, C, QW = x_flat.shape
    Wp = W + 2
    HWp = H * Wp
    if QW >= HWp:
        xf = x_flat[..., :HWp]
    else:
        xf = jnp.pad(x_flat, ((0, 0), (0, 0), (0, HWp - QW)))
    return xf.reshape(N, C, H, Wp)[..., :W]


def _slab_from_flat(x_flat, H, W, L):
    """Lane-dense flat f32 -> reflect-padded bf16 slab (N, C, L), row-major Hp*Wp + pad."""
    x = _nchw_from_flat(x_flat, H, W).astype(jnp.bfloat16)
    xp = jnp.pad(x, ((0, 0), (0, 0), (1, 1), (1, 1)), mode="reflect")
    N, C = xp.shape[0], xp.shape[1]
    Hp, Wp = H + 2, W + 2
    xp = xp.reshape(N, C, Hp * Wp)
    return jnp.pad(xp, ((0, 0), (0, 0), (0, L - Hp * Wp)))


# ---------------------------------------------------------------------------
# One ResnetLayer = one pallas_call
# ---------------------------------------------------------------------------
def resnet_layer(xpad_bf16, w_packed, xres, mask, *, H, W, tc):
    """out_flat = xres + InstanceNorm(Conv3x3(reflect-padded slab)); lane-dense layout."""
    N, C, L = xpad_bf16.shape
    QW = xres.shape[-1]
    kernel = functools.partial(resnet_layer_kernel, H=H, W=W, C=C, TC=tc, QW=QW)
    return pl.pallas_call(
        kernel,
        out_shape=jax.ShapeDtypeStruct((N, C, QW), xres.dtype),
        grid_spec=pltpu.PrefetchScalarGridSpec(
            num_scalar_prefetch=0,
            grid=(N, C // tc),
            in_specs=[
                # full-C bf16 padded slab, resident across the channel-tile axis
                pl.BlockSpec((None, C, L), lambda n, c: (n, 0, 0)),
                # packed weights, tiled over output channels
                pl.BlockSpec((tc, 9 * C), lambda n, c: (c, 0)),
                # f32 residual, lane-dense tile
                pl.BlockSpec((None, tc, QW), lambda n, c: (n, c, 0)),
                # valid-column mask for the InstanceNorm statistics
                pl.BlockSpec((1, QW), lambda n, c: (0, 0)),
            ],
            out_specs=pl.BlockSpec((None, tc, QW), lambda n, c: (n, c, 0)),
            scratch_shapes=[pltpu.VMEM((9 * C, QW), jnp.bfloat16)],
        ),
        compiler_params=pltpu.CompilerParams(
            # N is the core-parallel axis; channel tiles must be "arbitrary" so the
            # once-per-batch operand staging (and the resident slab) stay per-core.
            dimension_semantics=("parallel", "arbitrary"),
            vmem_limit_bytes=_vmem_limit_bytes(C, tc, L, QW),
        ),
    )(xpad_bf16, w_packed, xres, mask)


def _pack_weight(w):
    """(Cout, Cin, 3, 3) OIHW -> (Cout, 9*Cin) bf16, K index k = (kh*3+kw)*Cin + cin."""
    cout, cin = w.shape[0], w.shape[1]
    return jnp.transpose(w, (0, 2, 3, 1)).reshape(cout, 9 * cin).astype(jnp.bfloat16)


@jax.jit
def resnet_block_forward(x, w9s):
    N, C, H, W = x.shape
    Wp = W + 2
    Q = H * Wp - 2
    QW = _round_up(Q, 128)          # lane-dense working width (dense stores, MXU N dim)
    L = 2 * Wp + 2 + QW             # padded-flat slab length (>= Hp*Wp)
    tc = _pick_channel_tile(C)

    q = jnp.arange(QW)
    mask = (((q % Wp) < W) & (q < Q)).astype(jnp.float32).reshape(1, QW)

    # Activations are carried between layers in the lane-dense flat (N, C, QW) layout:
    # layer l+1's residual input is literally layer l's kernel output.
    xres = _flat_from_nchw(x, QW)                        # (N, C, QW) f32
    for w9 in w9s:
        slab = _slab_from_flat(xres, H, W, L)            # (N, C, L) bf16
        xres = resnet_layer(slab, w9, xres, mask, H=H, W=W, tc=tc)
    return _nchw_from_flat(xres, H, W)


# ---------------------------------------------------------------------------
# Params + pure-JAX reference (PyTorch semantics) for the correctness check
# ---------------------------------------------------------------------------
def make_resnet_block_params(key, dim, n_blocks):
    """kaiming_normal_(a=0, relu, fan_in) conv weights, zero bias (PyTorch init)."""
    params = []
    std = (2.0 / (dim * 9)) ** 0.5
    for _ in range(n_blocks):
        key, sub = jax.random.split(key)
        w = std * jax.random.normal(sub, (dim, dim, 3, 3), dtype=jnp.float32)
        b = jnp.zeros((dim,), dtype=jnp.float32)
        params.append((w, b))
    return params


def _reference_forward(x, params, matmul_dtype=None):
    """Pure-JAX reference of the PyTorch module.  With matmul_dtype=bf16 the conv
    operands are rounded exactly like the kernel's MXU inputs (f32 accumulation)."""
    out = x
    for (w, b) in params:
        xpad = jnp.pad(out, ((0, 0), (0, 0), (1, 1), (1, 1)), mode="reflect")
        if matmul_dtype is not None:
            xpad = xpad.astype(matmul_dtype).astype(jnp.float32)
            w = w.astype(matmul_dtype).astype(jnp.float32)
        conv = jax.lax.conv_general_dilated(
            xpad, w, window_strides=(1, 1), padding="VALID",
            dimension_numbers=("NCHW", "OIHW", "NCHW"),
            precision=jax.lax.Precision.HIGHEST)
        conv = conv + b[None, :, None, None]
        mean = jnp.mean(conv, axis=(2, 3), keepdims=True)
        var = jnp.mean(jnp.square(conv - mean), axis=(2, 3), keepdims=True)
        out = out + (conv - mean) * jax.lax.rsqrt(var + EPS)
    return out


if __name__ == "__main__":
    key = jax.random.PRNGKey(0)
    N, C, H, W = 2, 4, 16, 16
    n_blocks = 2

    kx, kp = jax.random.split(key)
    x = jax.random.normal(kx, (N, C, H, W), dtype=jnp.float32)
    params = make_resnet_block_params(kp, C, n_blocks)
    # Bias is not passed to the kernel: affine-free InstanceNorm cancels it exactly.
    w9s = tuple(_pack_weight(w) for (w, _b) in params)

    out = jax.block_until_ready(resnet_block_forward(x, w9s))
    assert out.shape == (N, C, H, W)

    # Tight check against a reference that uses the same bf16-rounded matmul operands.
    ref_bf = _reference_forward(x, params, matmul_dtype=jnp.bfloat16)
    assert jnp.allclose(out, ref_bf, atol=2e-3, rtol=2e-3), \
        float(jnp.max(jnp.abs(out - ref_bf)))
    # Loose check against the full-f32 PyTorch-semantics reference (bf16 MXU operands).
    ref = _reference_forward(x, params)
    assert jnp.allclose(out, ref, atol=1e-1, rtol=1e-1), \
        float(jnp.max(jnp.abs(out - ref)))

    print("KERNEL_OK")
</pallas_src>

<mosaic_0001>
module attributes {stable_mosaic.version = 11 : i64} {
  func.func @resnet_layer_kernel(%arg0: i32, %arg1: i32, %arg2: memref<1x4x422xbf16, #tpu.memory_space<vmem>>, %arg3: memref<4x36xbf16, #tpu.memory_space<vmem>>, %arg4: memref<1x4x384xf32, #tpu.memory_space<vmem>>, %arg5: memref<1x384xf32, #tpu.memory_space<vmem>>, %arg6: memref<1x4x384xf32, #tpu.memory_space<vmem>>, %arg7: memref<36x384xbf16, #tpu.memory_space<vmem>>) attributes {dimension_semantics = [#tpu.dimension_semantics<parallel>, #tpu.dimension_semantics<arbitrary>], iteration_bounds = array<i64: 2, 1>, scalar_prefetch = 0 : i64, scratch_operands = 1 : i64, tpu.core_type = #tpu.core_type<tc>, window_params = [{transform_indices = @transform_0, window_bounds = array<i64: 1, 4, 422>}, {transform_indices = @transform_1, window_bounds = array<i64: 4, 36>}, {transform_indices = @transform_2, window_bounds = array<i64: 1, 4, 384>}, {pipeline_mode = #tpu.pipeline_mode<synchronous>, transform_indices = @transform_3, window_bounds = array<i64: 1, 384>}, {transform_indices = @transform_4, window_bounds = array<i64: 1, 4, 384>}]} {
    %c0_i32 = arith.constant 0 : i32
    %0 = arith.cmpi eq, %arg1, %c0_i32 : i32
    %1 = arith.extui %0 : i1 to i32
    %c0_i32_0 = arith.constant 0 : i32
    %2 = arith.cmpi ne, %1, %c0_i32_0 : i32
    scf.if %2 {
      %c0_17 = arith.constant 0 : index
      %c0_18 = arith.constant 0 : index
      %c0_19 = arith.constant 0 : index
      %35 = vector.load %arg2[%c0_17, %c0_18, %c0_19] : memref<1x4x422xbf16, #tpu.memory_space<vmem>>, vector<1x4x384xbf16>
      %36 = vector.shape_cast %35 : vector<1x4x384xbf16> to vector<4x384xbf16>
      %c0_20 = arith.constant 0 : index
      %c0_21 = arith.constant 0 : index
      %37 = vector.load %arg7[%c0_20, %c0_21] : memref<36x384xbf16, #tpu.memory_space<vmem>>, vector<4x384xbf16>
      tpu.vector_store %arg7[%c0_20, %c0_21], %36 {strides = array<i32>} : memref<36x384xbf16, #tpu.memory_space<vmem>>, vector<4x384xbf16>,
      %c0_22 = arith.constant 0 : index
      %c0_23 = arith.constant 0 : index
      %c1 = arith.constant 1 : index
      %38 = vector.load %arg2[%c0_22, %c0_23, %c1] : memref<1x4x422xbf16, #tpu.memory_space<vmem>>, vector<1x4x384xbf16>
      %39 = vector.shape_cast %38 : vector<1x4x384xbf16> to vector<4x384xbf16>
      %c4 = arith.constant 4 : index
      %c0_24 = arith.constant 0 : index
      %40 = vector.load %arg7[%c4, %c0_24] : memref<36x384xbf16, #tpu.memory_space<vmem>>, vector<4x384xbf16>
      tpu.vector_store %arg7[%c4, %c0_24], %39 {strides = array<i32>} : memref<36x384xbf16, #tpu.memory_space<vmem>>, vector<4x384xbf16>,
      %c0_25 = arith.constant 0 : index
      %c0_26 = arith.constant 0 : index
      %c2 = arith.constant 2 : index
      %41 = vector.load %arg2[%c0_25, %c0_26, %c2] : memref<1x4x422xbf16, #tpu.memory_space<vmem>>, vector<1x4x384xbf16>
      %42 = vector.shape_cast %41 : vector<1x4x384xbf16> to vector<4x384xbf16>
      %c8 = arith.constant 8 : index
      %c0_27 = arith.constant 0 : index
      %43 = vector.load %arg7[%c8, %c0_27] : memref<36x384xbf16, #tpu.memory_space<vmem>>, vector<4x384xbf16>
      tpu.vector_store %arg7[%c8, %c0_27], %42 {strides = array<i32>} : memref<36x384xbf16, #tpu.memory_space<vmem>>, vector<4x384xbf16>,
      %c0_28 = arith.constant 0 : index
      %c0_29 = arith.constant 0 : index
      %c18 = arith.constant 18 : index
      %44 = vector.load %arg2[%c0_28, %c0_29, %c18] : memref<1x4x422xbf16, #tpu.memory_space<vmem>>, vector<1x4x384xbf16>
      %45 = vector.shape_cast %44 : vector<1x4x384xbf16> to vector<4x384xbf16>
      %c12 = arith.constant 12 : index
      %c0_30 = arith.constant 0 : index
      %46 = vector.load %arg7[%c12, %c0_30] : memref<36x384xbf16, #tpu.memory_space<vmem>>, vector<4x384xbf16>
      tpu.vector_store %arg7[%c12, %c0_30], %45 {strides = array<i32>} : memref<36x384xbf16, #tpu.memory_space<vmem>>, vector<4x384xbf16>,
      %c0_31 = arith.constant 0 : index
      %c0_32 = arith.constant 0 : index
      %c19 = arith.constant 19 : index
      %47 = vector.load %arg2[%c0_31, %c0_32, %c19] : memref<1x4x422xbf16, #tpu.memory_space<vmem>>, vector<1x4x384xbf16>
      %48 = vector.shape_cast %47 : vector<1x4x384xbf16> to vector<4x384xbf16>
      %c16 = arith.constant 16 : index
      %c0_33 = arith.constant 0 : index
      %49 = vector.load %arg7[%c16, %c0_33] : memref<36x384xbf16, #tpu.memory_space<vmem>>, vector<4x384xbf16>
      tpu.vector_store %arg7[%c16, %c0_33], %48 {strides = array<i32>} : memref<36x384xbf16, #tpu.memory_space<vmem>>, vector<4x384xbf16>,
      %c0_34 = arith.constant 0 : index
      %c0_35 = arith.constant 0 : index
      %c20 = arith.constant 20 : index
      %50 = vector.load %arg2[%c0_34, %c0_35, %c20] : memref<1x4x422xbf16, #tpu.memory_space<vmem>>, vector<1x4x384xbf16>
      %51 = vector.shape_cast %50 : vector<1x4x384xbf16> to vector<4x384xbf16>
      %c20_36 = arith.constant 20 : index
      %c0_37 = arith.constant 0 : index
      %52 = vector.load %arg7[%c20_36, %c0_37] : memref<36x384xbf16, #tpu.memory_space<vmem>>, vector<4x384xbf16>
      tpu.vector_store %arg7[%c20_36, %c0_37], %51 {strides = array<i32>} : memref<36x384xbf16, #tpu.memory_space<vmem>>, vector<4x384xbf16>,
      %c0_38 = arith.constant 0 : index
      %c0_39 = arith.constant 0 : index
      %c36 = arith.constant 36 : index
      %53 = vector.load %arg2[%c0_38, %c0_39, %c36] : memref<1x4x422xbf16, #tpu.memory_space<vmem>>, vector<1x4x384xbf16>
      %54 = vector.shape_cast %53 : vector<1x4x384xbf16> to vector<4x384xbf16>
      %c24 = arith.constant 24 : index
      %c0_40 = arith.constant 0 : index
      %55 = vector.load %arg7[%c24, %c0_40] : memref<36x384xbf16, #tpu.memory_space<vmem>>, vector<4x384xbf16>
      tpu.vector_store %arg7[%c24, %c0_40], %54 {strides = array<i32>} : memref<36x384xbf16, #tpu.memory_space<vmem>>, vector<4x384xbf16>,
      %c0_41 = arith.constant 0 : index
      %c0_42 = arith.constant 0 : index
      %c37 = arith.constant 37 : index
      %56 = vector.load %arg2[%c0_41, %c0_42, %c37] : memref<1x4x422xbf16, #tpu.memory_space<vmem>>, vector<1x4x384xbf16>
      %57 = vector.shape_cast %56 : vector<1x4x384xbf16> to vector<4x384xbf16>
      %c28 = arith.constant 28 : index
      %c0_43 = arith.constant 0 : index
      %58 = vector.load %arg7[%c28, %c0_43] : memref<36x384xbf16, #tpu.memory_space<vmem>>, vector<4x384xbf16>
      tpu.vector_store %arg7[%c28, %c0_43], %57 {strides = array<i32>} : memref<36x384xbf16, #tpu.memory_space<vmem>>, vector<4x384xbf16>,
      %c0_44 = arith.constant 0 : index
      %c0_45 = arith.constant 0 : index
      %c38 = arith.constant 38 : index
      %59 = vector.load %arg2[%c0_44, %c0_45, %c38] : memref<1x4x422xbf16, #tpu.memory_space<vmem>>, vector<1x4x384xbf16>
      %60 = vector.shape_cast %59 : vector<1x4x384xbf16> to vector<4x384xbf16>
      %c32 = arith.constant 32 : index
      %c0_46 = arith.constant 0 : index
      %61 = vector.load %arg7[%c32, %c0_46] : memref<36x384xbf16, #tpu.memory_space<vmem>>, vector<4x384xbf16>
      tpu.vector_store %arg7[%c32, %c0_46], %60 {strides = array<i32>} : memref<36x384xbf16, #tpu.memory_space<vmem>>, vector<4x384xbf16>,
    } else {
    }
    %c0 = arith.constant 0 : index
    %c0_1 = arith.constant 0 : index
    %3 = vector.load %arg3[%c0, %c0_1] : memref<4x36xbf16, #tpu.memory_space<vmem>>, vector<4x36xbf16>
    %c0_2 = arith.constant 0 : index
    %c0_3 = arith.constant 0 : index
    %4 = vector.load %arg7[%c0_2, %c0_3] : memref<36x384xbf16, #tpu.memory_space<vmem>>, vector<36x384xbf16>
    %cst = arith.constant dense<0.000000e+00> : vector<4x384xf32>
    %5 = tpu.matmul %3, %4, %cst {dimension_numbers = #tpu.dot_dimension_numbers<[1], [0], [0], [1], [0, 0, 1, 1], [], []>} : vector<4x36xbf16>, vector<36x384xbf16>, vector<4x384xf32> -> vector<4x384xf32>
    %c0_4 = arith.constant 0 : index
    %c0_5 = arith.constant 0 : index
    %6 = vector.load %arg5[%c0_4, %c0_5] : memref<1x384xf32, #tpu.memory_space<vmem>>, vector<1x384xf32>
    %7 = vector.broadcast %6 : vector<1x384xf32> to vector<4x384xf32>
    %8 = arith.mulf %5, %7 : vector<4x384xf32>
    %cst_6 = arith.constant dense<0.000000e+00> : vector<4xf32>
    %9 = vector.multi_reduction <add>, %8, %cst_6 [1] : vector<4x384xf32> to vector<4xf32>
    %10 = vector.shape_cast %9 : vector<4xf32> to vector<4x1xf32>
    %cst_7 = arith.constant 3.906250e-03 : f32
    %11 = vector.broadcast %cst_7 : f32 to vector<4x1xf32>
    %12 = arith.mulf %10, %11 : vector<4x1xf32>
    %13 = vector.broadcast %12 : vector<4x1xf32> to vector<4x384xf32>
    %14 = arith.subf %5, %13 : vector<4x384xf32>
    %15 = vector.broadcast %6 : vector<1x384xf32> to vector<4x384xf32>
    %16 = arith.mulf %14, %15 : vector<4x384xf32>
    %17 = arith.mulf %16, %16 : vector<4x384xf32>
    %cst_8 = arith.constant dense<0.000000e+00> : vector<4xf32>
    %18 = vector.multi_reduction <add>, %17, %cst_8 [1] : vector<4x384xf32> to vector<4xf32>
    %19 = vector.shape_cast %18 : vector<4xf32> to vector<4x1xf32>
    %cst_9 = arith.constant 3.906250e-03 : f32
    %20 = vector.broadcast %cst_9 : f32 to vector<4x1xf32>
    %21 = arith.mulf %19, %20 : vector<4x1xf32>
    %22 = vector.broadcast %12 : vector<4x1xf32> to vector<4x384xf32>
    %23 = arith.subf %5, %22 : vector<4x384xf32>
    %cst_10 = arith.constant 9.99999974E-6 : f32
    %24 = vector.broadcast %cst_10 : f32 to vector<4x1xf32>
    %25 = arith.addf %21, %24 : vector<4x1xf32>
    %26 = math.rsqrt %25 : vector<4x1xf32>
    %27 = vector.broadcast %26 : vector<4x1xf32> to vector<4x384xf32>
    %28 = arith.mulf %23, %27 : vector<4x384xf32>
    %c0_11 = arith.constant 0 : index
    %c0_12 = arith.constant 0 : index
    %c0_13 = arith.constant 0 : index
    %29 = vector.load %arg4[%c0_11, %c0_12, %c0_13] : memref<1x4x384xf32, #tpu.memory_space<vmem>>, vector<1x4x384xf32>
    %30 = vector.shape_cast %29 : vector<1x4x384xf32> to vector<4x384xf32>
    %31 = arith.addf %30, %28 : vector<4x384xf32>
    %c0_14 = arith.constant 0 : index
    %c0_15 = arith.constant 0 : index
    %c0_16 = arith.constant 0 : index
    %32 = vector.load %arg6[%c0_14, %c0_15, %c0_16] : memref<1x4x384xf32, #tpu.memory_space<vmem>>, vector<1x4x384xf32>
    %33 = vector.shape_cast %32 : vector<1x4x384xf32> to vector<4x384xf32>
    %34 = vector.shape_cast %31 : vector<4x384xf32> to vector<1x4x384xf32>
    tpu.vector_store %arg6[%c0_14, %c0_15, %c0_16], %34 {strides = array<i32>} : memref<1x4x384xf32, #tpu.memory_space<vmem>>, vector<1x4x384xf32>,
    return
  }
  func.func @transform_0(%arg0: i32, %arg1: i32) -> (i32, i32, i32) {
    %c0_i32 = arith.constant 0 : i32
    %c0_i32_0 = arith.constant 0 : i32
    %c0_i32_1 = arith.constant 0 : i32
    return %arg0, %c0_i32, %c0_i32_0 : i32, i32, i32
  }
  func.func @transform_1(%arg0: i32, %arg1: i32) -> (i32, i32) {
    %c0_i32 = arith.constant 0 : i32
    %c0_i32_0 = arith.constant 0 : i32
    return %arg1, %c0_i32 : i32, i32
  }
  func.func @transform_2(%arg0: i32, %arg1: i32) -> (i32, i32, i32) {
    %c0_i32 = arith.constant 0 : i32
    %c0_i32_0 = arith.constant 0 : i32
    return %arg0, %arg1, %c0_i32 : i32, i32, i32
  }
  func.func @transform_3(%arg0: i32, %arg1: i32) -> (i32, i32) {
    %c0_i32 = arith.constant 0 : i32
    %c0_i32_0 = arith.constant 0 : i32
    %c0_i32_1 = arith.constant 0 : i32
    return %c0_i32, %c0_i32_0 : i32, i32
  }
  func.func @transform_4(%arg0: i32, %arg1: i32) -> (i32, i32, i32) {
    %c0_i32 = arith.constant 0 : i32
    %c0_i32_0 = arith.constant 0 : i32
    return %arg0, %arg1, %c0_i32 : i32, i32, i32
  }
}

</mosaic_0001>

<llo_original>
// kernel: resnet_block_forward.2
$region0: #{resnet_block_forward.2}
  #allocation0 [shape = 'u32[]', space=smem, size = 0x4, offset = 0x4, fixed_abs, tag = 'smem constant byte address 0x4 - core index']
  #allocation1 [shape = 'u32[144,128]{1,0:T(1,128)}', space=vmem, size = 0x12000, scoped, tag = 'internal scratch']
  #allocation2 [shape = 'bf16[36,384]{1,0:T(8,128)(2,1)}', space=vmem, size = 0x7800, scoped, tag = 'scratch operand']
  %s0 = inlined_call_operand.vmem [shape: bf16[2,4,422], index: 0, kind: input, shape index: {}]
  %s1 = inlined_call_operand.vmem [shape: bf16[4,36], index: 1, kind: input, shape index: {}]
  %s2 = inlined_call_operand.vmem [shape: f32[2,4,384], index: 2, kind: input, shape index: {}]
  %s3 = inlined_call_operand.vmem [shape: f32[1,384], index: 3, kind: input, shape index: {}]
  %s4 = inlined_call_operand.vmem [shape: f32[2,4,384], index: 4, kind: output, shape index: {}]
  %s5 = sld [smem:[#allocation0]]
  $region53: #{resnet_block_forward.2} parent=0
    _
  %s7 = ssub.s32 1, %s5
  %s8 = scalar_select 0, %s7, %s5
  loop: start=0, step=1, limit=4
  $region2: #{resnet_block_forward.2} parent=0 // loop_pre_header
    _
  $region3: #{resnet_block_forward.2} parent=0 // loop_header
    %s10 = sphi 0, %s14
    %p11 = scmp.ge.s32.totalorder %s10, 4
    %s17 = sphi 0, %s29
    %s18 = sphi 0, %s25
    %s19 = sphi 0, %s17
    %s20 = sphi 0, %s18
    %s21 = sphi 0, %s19
    %s22 = sphi 0, %s20
    %s32 = sphi 0, %s34
    %s35 = sphi 0, %s32
    %s36 = sphi 0, %s35
    %s52 = sphi 0, %s36
    %s58 = sphi 0, %s60
    %s61 = sphi 0, %s58
    %s62 = sphi 0, %s61
    %s78 = sphi 0, %s62
    %s86 = sphi 0, %s88
    %s89 = sphi 0, %s86
    %s90 = sphi 0, %s89
    %s106 = sphi 0, %s90
    %s110 = sphi 0, %s110
    %s112 = sphi 0, %s110
    %s113 = sphi 0, %s112
    %s127 = sphi 0, %s113
    %s135 = sphi 0, %s137
    %s138 = sphi 0, %s135
    %s139 = sphi 0, %s138
    %s155 = sphi 0, %s139
  $region4: #{resnet_block_forward.2} parent=0 // loop_header_branch
    %13 = sbr.rel (%p11) target = $region8
  $region5: #{resnet_block_forward.2} parent=0 // loop_body
    %s15 = ssub.s32 %s10, 1
    %s16 = ssub.s32 %s10, 2
    %s23 = sadd.s32 1, %s18
    %p24 = scmp.ge.s32.totalorder %s23, 1
    %s25 = scalar_select %p24, 0, %s23
    %s26 = sadd.s32 1, %s17
    %s27 = scalar_select %p24, %s26, %s17
    %p28 = scmp.ge.s32.totalorder %s27, 2
    %s29 = scalar_select %p28, 0, %s27
    %s30 = ssub.s32 %s17, %s29
    %p31 = scmp.eq.s32.totalorder %s30, 0
    %s33 = sadd.s32 %s32, 1
    %s34 = scalar_select %p31, %s32, %s33
    %p37 = pneg %p31
    %p38 = scmp.eq.s32.totalorder %s10, 1
    %p39 = por %p37, %p38
    %p40 = scmp.ne.s32.totalorder %s32, %s35
    %p41 = scmp.eq.s32.totalorder %s10, 0
    %p42 = por %p40, %p41
    %p43 = scmp.ne.s32.totalorder %s32, %s35
    %p44 = scmp.eq.s32.totalorder %s15, 1
    %p45 = por %p43, %p44
    %p46 = scmp.ne.s32.totalorder %s35, %s36
    %p47 = scmp.eq.s32.totalorder %s15, 0
    %p48 = por %p46, %p47
    %p49 = scmp.ne.s32.totalorder %s35, %s36
    %p50 = scmp.eq.s32.totalorder %s16, 1
    %p51 = por %p49, %p50
    %p53 = scmp.ne.s32.totalorder %s36, %s52
    %p54 = scmp.eq.s32.totalorder %s16, 0
    %p55 = por %p53, %p54
    %s56 = ssub.s32 %s18, %s25
    %p57 = scmp.eq.s32.totalorder %s56, 0
    %s59 = sadd.s32 %s58, 1
    %s60 = scalar_select %p57, %s58, %s59
    %p63 = pneg %p57
    %p64 = scmp.eq.s32.totalorder %s10, 1
    %p65 = por %p63, %p64
    %p66 = scmp.ne.s32.totalorder %s58, %s61
    %p67 = scmp.eq.s32.totalorder %s10, 0
    %p68 = por %p66, %p67
    %p69 = scmp.ne.s32.totalorder %s58, %s61
    %p70 = scmp.eq.s32.totalorder %s15, 1
    %p71 = por %p69, %p70
    %p72 = scmp.ne.s32.totalorder %s61, %s62
    %p73 = scmp.eq.s32.totalorder %s15, 0
    %p74 = por %p72, %p73
    %p75 = scmp.ne.s32.totalorder %s61, %s62
    %p76 = scmp.eq.s32.totalorder %s16, 1
    %p77 = por %p75, %p76
    %p79 = scmp.ne.s32.totalorder %s62, %s78
    %p80 = scmp.eq.s32.totalorder %s16, 0
    %p81 = por %p79, %p80
    %s82 = ssub.s32 %s17, %s29
    %s83 = ssub.s32 %s18, %s25
    %s84 = sor.u32 %s82, %s83
    %p85 = scmp.eq.s32.totalorder %s84, 0
    %s87 = sadd.s32 %s86, 1
    %s88 = scalar_select %p85, %s86, %s87
    %p91 = pneg %p85
    %p92 = scmp.eq.s32.totalorder %s10, 1
    %p93 = por %p91, %p92
    %p94 = scmp.ne.s32.totalorder %s86, %s89
    %p95 = scmp.eq.s32.totalorder %s10, 0
    %p96 = por %p94, %p95
    %p97 = scmp.ne.s32.totalorder %s86, %s89
    %p98 = scmp.eq.s32.totalorder %s15, 1
    %p99 = por %p97, %p98
    %p100 = scmp.ne.s32.totalorder %s89, %s90
    %p101 = scmp.eq.s32.totalorder %s15, 0
    %p102 = por %p100, %p101
    %p103 = scmp.ne.s32.totalorder %s89, %s90
    %p104 = scmp.eq.s32.totalorder %s16, 1
    %p105 = por %p103, %p104
    %p107 = scmp.ne.s32.totalorder %s90, %s106
    %p108 = scmp.eq.s32.totalorder %s16, 0
    %p109 = por %p107, %p108
    %s111 = sadd.s32 %s110, 1
    %p114 = scmp.eq.s32.totalorder %s10, 1
    %p115 = scmp.ne.s32.totalorder %s110, %s112
    %p116 = scmp.eq.s32.totalorder %s10, 0
    %p117 = por %p115, %p116
    %p118 = scmp.ne.s32.totalorder %s110, %s112
    %p119 = scmp.eq.s32.totalorder %s15, 1
    %p120 = por %p118, %p119
    %p121 = scmp.ne.s32.totalorder %s112, %s113
    %p122 = scmp.eq.s32.totalorder %s15, 0
    %p123 = por %p121, %p122
    %p124 = scmp.ne.s32.totalorder %s112, %s113
    %p125 = scmp.eq.s32.totalorder %s16, 1
    %p126 = por %p124, %p125
    %p128 = scmp.ne.s32.totalorder %s113, %s127
    %p129 = scmp.eq.s32.totalorder %s16, 0
    %p130 = por %p128, %p129
    %s131 = ssub.s32 %s17, %s29
    %s132 = ssub.s32 %s18, %s25
    %s133 = sor.u32 %s131, %s132
    %p134 = scmp.eq.s32.totalorder %s133, 0
    %s136 = sadd.s32 %s135, 1
    %s137 = scalar_select %p134, %s135, %s136
    %p140 = pneg %p134
    %p141 = scmp.eq.s32.totalorder %s10, 1
    %p142 = por %p140, %p141
    %p143 = scmp.ne.s32.totalorder %s135, %s138
    %p144 = scmp.eq.s32.totalorder %s10, 0
    %p145 = por %p143, %p144
    %p146 = scmp.ne.s32.totalorder %s135, %s138
    %p147 = scmp.eq.s32.totalorder %s15, 1
    %p148 = por %p146, %p147
    %p149 = scmp.ne.s32.totalorder %s138, %s139
    %p150 = scmp.eq.s32.totalorder %s15, 0
    %p151 = por %p149, %p150
    %p152 = scmp.ne.s32.totalorder %s138, %s139
    %p153 = scmp.eq.s32.totalorder %s16, 1
    %p154 = por %p152, %p153
    %p156 = scmp.ne.s32.totalorder %s139, %s155
    %p157 = scmp.eq.s32.totalorder %s16, 0
    %p158 = por %p156, %p157
    %p159 = scmp.le.s32.totalorder 1, %s10
    %p160 = scmp.lt.s32.totalorder %s10, 3
    %p161 = pnand %p159, %p160
    %p162 = pneg %p161
    // Predicated region
    $region9: #{resnet_block_forward.2} parent=5 // pred_check
      _
    $region10: #{resnet_block_forward.2} parent=5 // pred_check_branch
      %164 = sbr.rel (%p161) target = $region12
    $region11: #{resnet_block_forward.2} parent=5 // pred_region
      %s165 = ssub.s32 %s10, 1
      // Predicated region
      $region13: #{resnet_block_forward.2} parent=11 // pred_check
        %p166 = pneg %p74
      $region14: #{resnet_block_forward.2} parent=11 // pred_check_branch
        %168 = sbr.rel (%p166) target = $region16
      $region15: #{resnet_block_forward.2} parent=11 // pred_region
        %p169 = scmp.lt.s32.totalorder %s20, 0
        %s170 = scalar_select %p169, %s20, 0
        %s171 = smul.addr %s170, 2
        %s172 = scalar_lea.vmem %s1, %s171
      $region16: #{resnet_block_forward.2} parent=11 // pred_fallthru
        _
      // Predicated region
      $region17: #{resnet_block_forward.2} parent=11 // pred_check
        %p173 = pneg %p123
      $region18: #{resnet_block_forward.2} parent=11 // pred_check_branch
        %175 = sbr.rel (%p173) target = $region20
      $region19: #{resnet_block_forward.2} parent=11 // pred_region
        _
      $region20: #{resnet_block_forward.2} parent=11 // pred_fallthru
        _
    $region12: #{resnet_block_forward.2} parent=5 // pred_fallthru
      _
    %p176 = scmp.lt.s32.totalorder %s10, 2
    // Predicated region
    $region21: #{resnet_block_forward.2} parent=5 // pred_check
      %p177 = pneg %p176
    $region22: #{resnet_block_forward.2} parent=5 // pred_check_branch
      %179 = sbr.rel (%p177) target = $region24
    $region23: #{resnet_block_forward.2} parent=5 // pred_region
      // Predicated region
      $region25: #{resnet_block_forward.2} parent=23 // pred_check
        %p180 = pneg %p42
      $region26: #{resnet_block_forward.2} parent=23 // pred_check_branch
        %182 = sbr.rel (%p180) target = $region28
      $region27: #{resnet_block_forward.2} parent=23 // pred_region
        %p183 = scmp.lt.s32.totalorder %s17, 1
        %s184 = scalar_select %p183, %s17, 1
        %s185 = smul.addr %s184, 4
        %s186 = smul.addr %s185, 2
        %s187 = scalar_lea.vmem %s0, %s186
      $region28: #{resnet_block_forward.2} parent=23 // pred_fallthru
        _
      // Predicated region
      $region29: #{resnet_block_forward.2} parent=23 // pred_check
        %p188 = pneg %p96
      $region30: #{resnet_block_forward.2} parent=23 // pred_check_branch
        %190 = sbr.rel (%p188) target = $region32
      $region31: #{resnet_block_forward.2} parent=23 // pred_region
        %p191 = scmp.lt.s32.totalorder %s17, 1
        %s192 = scalar_select %p191, %s17, 1
        %p193 = scmp.lt.s32.totalorder %s18, 0
        %s194 = scalar_select %p193, %s18, 0
        %s195 = smul.addr %s194, 3
        %s196 = smul.addr %s192, 3
        %s197 = sadd.s32 %s195, %s196
        %s198 = smul.addr %s197, 4
        %s199 = scalar_lea.vmem %s2, %s198
      $region32: #{resnet_block_forward.2} parent=23 // pred_fallthru
        _
    $region24: #{resnet_block_forward.2} parent=5 // pred_fallthru
      _
    %p200 = scmp.le.s32.totalorder 1, %s10
    %p201 = scmp.lt.s32.totalorder %s10, 3
    %p202 = pnand %p200, %p201
    %p203 = pneg %p202
    // Predicated region
    $region33: #{resnet_block_forward.2} parent=5 // pred_check
      _
    $region34: #{resnet_block_forward.2} parent=5 // pred_check_branch
      %205 = sbr.rel (%p202) target = $region36
    $region35: #{resnet_block_forward.2} parent=5 // pred_region
      %s206 = ssub.s32 %s10, 1
      %p207 = scmp.lt.s32.totalorder %s19, 1
      %s208 = scalar_select %p207, %s19, 1
      %s209 = smul.addr %s208, 4
      %s210 = smul.addr %s209, 2
      %s211 = scalar_lea.vmem %s0, %s210
      %p212 = pneg %p48
      %p213 = pneg %p45
      %p214 = scmp.lt.s32.totalorder %s20, 0
      %s215 = scalar_select %p214, %s20, 0
      %s216 = smul.addr %s215, 2
      %s217 = scalar_lea.vmem %s1, %s216
      %p218 = pneg %p74
      %p219 = pneg %p71
      %p220 = scmp.lt.s32.totalorder %s19, 1
      %s221 = scalar_select %p220, %s19, 1
      %p222 = scmp.lt.s32.totalorder %s20, 0
      %s223 = scalar_select %p222, %s20, 0
      %s224 = smul.addr %s223, 3
      %s225 = smul.addr %s221, 3
      %s226 = sadd.s32 %s224, %s225
      %s227 = smul.addr %s226, 4
      %s228 = scalar_lea.vmem %s2, %s227
      %p229 = pneg %p102
      %p230 = pneg %p99
      %p231 = pneg %p123
      %p232 = pneg %p120
      %p233 = pneg %p151
      %p234 = pneg %p148
      %p235 = scmp.lt.s32.totalorder %s19, 1
      %s236 = scalar_select %p235, %s19, 1
      %p237 = scmp.lt.s32.totalorder %s20, 0
      %s238 = scalar_select %p237, %s20, 0
      %s239 = smul.addr %s238, 3
      %s240 = smul.addr %s236, 3
      %s241 = sadd.s32 %s239, %s240
      %s242 = smul.addr %s241, 4
      %s243 = scalar_lea.vmem %s4, %s242
      %p244 = scmp.lt.s32.totalorder %s19, 1
      %s245 = scalar_select %p244, %s19, 1
      %s246 = smul.addr %s245, 4
      %s247 = smul.addr %s246, 2
      %s248 = scalar_lea.vmem %s0, %s247
      %p249 = scmp.lt.s32.totalorder %s20, 0
      %s250 = scalar_select %p249, %s20, 0
      %s251 = smul.addr %s250, 2
      %s252 = scalar_lea.vmem %s1, %s251
      %p253 = scmp.lt.s32.totalorder %s19, 1
      %s254 = scalar_select %p253, %s19, 1
      %p255 = scmp.lt.s32.totalorder %s20, 0
      %s256 = scalar_select %p255, %s20, 0
      %s257 = smul.addr %s256, 3
      %s258 = smul.addr %s254, 3
      %s259 = sadd.s32 %s257, %s258
      %s260 = smul.addr %s259, 4
      %s261 = scalar_lea.vmem %s2, %s260
      %p262 = scmp.lt.s32.totalorder %s19, 1
      %s263 = scalar_select %p262, %s19, 1
      %p264 = scmp.lt.s32.totalorder %s20, 0
      %s265 = scalar_select %p264, %s20, 0
      %s266 = smul.addr %s265, 3
      %s267 = smul.addr %s263, 3
      %s268 = sadd.s32 %s266, %s267
      %s269 = smul.addr %s268, 4
      %s270 = scalar_lea.vmem %s4, %s269
      %p272 = scmp.eq.s32.totalorder %s20, 0
      // Predicated region
      $region37: #{resnet_block_forward.2} parent=35 // pred_check
        %p273 = pneg %p272
      $region38: #{resnet_block_forward.2} parent=35 // pred_check_branch
        %275 = sbr.rel (%p273) target = $region40
      $region39: #{resnet_block_forward.2} parent=35 // pred_region
        %v276 = vld [vmem:[%s248] sm:$0x3f]
        %v278 = vcombine.high %v276, %v276
        %v280 = vunpack.c.l.s4 1983009808
        %v281 = vunpack.c.0.s8 %v280
        %v282 = vlaneseq
        %v283 = vshrl.u32 %v282, 7
        %v284 = vsub.s32 %v281, %v283
        %v285 = vrot.slane %v276, %v284
        %v287 = vunpack.c.l.s4 1983009808
        %v288 = vunpack.c.0.s8 %v287
        %v289 = vlaneseq
        %v290 = vshrl.u32 %v289, 7
        %v291 = vsub.s32 %v288, %v290
        %v292 = vrot.slane %v278, %v291
        %295 = vst [vmem:[#allocation2] sm:$0x33] %v285
        %296 = vst [vmem:[#allocation2 + $0x8] sm:$0x3] %v292
        %v297 = vld [vmem:[%s248] sm:$0xff]
        %v299 = vcombine.low %v297, %v297
        %v301 = vunpack.c.l.s4 1983009808
        %v302 = vunpack.c.0.s8 %v301
        %v303 = vlaneseq
        %v304 = vshrl.u32 %v303, 7
        %v305 = vsub.s32 %v302, %v304
        %v306 = vrot.slane %v299, %v305
        %v308 = vunpack.c.l.s4 1983009808
        %v309 = vunpack.c.0.s8 %v308
        %v310 = vlaneseq
        %v311 = vshrl.u32 %v310, 7
        %v312 = vsub.s32 %v309, %v311
        %v313 = vrot.slane %v297, %v312
        %314 = vrot.lane.b32.xlu0 %v306, 127
        %v315 = vpop.permute.xlu0 %314
        %316 = vrot.lane.b32.xlu0 %v313, 127
        %v317 = vpop.permute.xlu0 %316
        %v318 = vrot.slane %v315, 4
        %v319 = vrot.slane %v317, 4
        %vm320 = vcmask 1043456
        %v321 = vsel %vm320, %v318, %v319
        %vm322 = vcmask 1039360
        %v323 = vsel %vm322, %v315, %v321
        %v324 = vsel %vm322, %v317, %v319
        %327 = vst [vmem:[#allocation2] sm:$0xcc] %v323
        %328 = vst [vmem:[#allocation2 + $0x8] sm:$0xc] %v324
        %v329 = vld [vmem:[%s248] sm:$0xff]
        %v331 = vcombine.high %v329, %v329
        %v333 = vunpack.c.l.s4 1983009808
        %v334 = vunpack.c.0.s8 %v333
        %v335 = vlaneseq
        %v336 = vshrl.u32 %v335, 7
        %v337 = vsub.s32 %v334, %v336
        %v338 = vrot.slane %v329, %v337
        %v340 = vunpack.c.l.s4 1983009808
        %v341 = vunpack.c.0.s8 %v340
        %v342 = vlaneseq
        %v343 = vshrl.u32 %v342, 7
        %v344 = vsub.s32 %v341, %v343
        %v345 = vrot.slane %v331, %v344
        %346 = vrot.lane.b32.xlu0 %v338, 126
        %v347 = vpop.permute.xlu0 %346
        %348 = vrot.lane.b32.xlu0 %v345, 126
        %v349 = vpop.permute.xlu0 %348
        %v350 = vrot.slane %v347, 4
        %v351 = vrot.slane %v349, 4
        %v352 = vsel %vm320, %v350, %v351
        %vm353 = vcmask 1031168
        %v354 = vsel %vm353, %v347, %v352
        %v355 = vsel %vm353, %v349, %v351
        %358 = vst [vmem:[#allocation2 + $0xc] sm:$0x33] %v354
        %359 = vst [vmem:[#allocation2 + $0x14] sm:$0x3] %v355
        %v360 = vld [vmem:[%s248] sm:$0xff]
        %v362 = vcombine.low %v360, %v360
        %v364 = vunpack.c.l.s4 1983009808
        %v365 = vunpack.c.0.s8 %v364
        %v366 = vlaneseq
        %v367 = vshrl.u32 %v366, 7
        %v368 = vsub.s32 %v365, %v367
        %v369 = vrot.slane %v362, %v368
        %v371 = vunpack.c.l.s4 1983009808
        %v372 = vunpack.c.0.s8 %v371
        %v373 = vlaneseq
        %v374 = vshrl.u32 %v373, 7
        %v375 = vsub.s32 %v372, %v374
        %v376 = vrot.slane %v360, %v375
        %377 = vrot.lane.b32.xlu0 %v369, 110
        %v378 = vpop.permute.xlu0 %377
        %379 = vrot.lane.b32.xlu0 %v376, 110
        %v380 = vpop.permute.xlu0 %379
        %v381 = vrot.slane %v378, 4
        %v382 = vrot.slane %v380, 4
        %v383 = vsel %vm320, %v381, %v382
        %vm384 = vcmask 900096
        %v385 = vsel %vm384, %v378, %v383
        %v386 = vsel %vm384, %v380, %v382
        %389 = vst [vmem:[#allocation2 + $0xc] sm:$0xcc] %v385
        %390 = vst [vmem:[#allocation2 + $0x14] sm:$0xc] %v386
        %v391 = vld [vmem:[%s248] sm:$0xff]
        %v393 = vcombine.high %v391, %v391
        %v395 = vunpack.c.l.s4 1983009808
        %v396 = vunpack.c.0.s8 %v395
        %v397 = vlaneseq
        %v398 = vshrl.u32 %v397, 7
        %v399 = vsub.s32 %v396, %v398
        %v400 = vrot.slane %v391, %v399
        %v402 = vunpack.c.l.s4 1983009808
        %v403 = vunpack.c.0.s8 %v402
        %v404 = vlaneseq
        %v405 = vshrl.u32 %v404, 7
        %v406 = vsub.s32 %v403, %v405
        %v407 = vrot.slane %v393, %v406
        %408 = vrot.lane.b32.xlu0 %v400, 109
        %v409 = vpop.permute.xlu0 %408
        %410 = vrot.lane.b32.xlu0 %v407, 109
        %v411 = vpop.permute.xlu0 %410
        %v412 = vrot.slane %v409, 4
        %v413 = vrot.slane %v411, 4
        %v414 = vsel %vm320, %v412, %v413
        %vm415 = vcmask 891904
        %v416 = vsel %vm415, %v409, %v414
        %v417 = vsel %vm415, %v411, %v413
        %420 = vst [vmem:[#allocation2 + $0x18] sm:$0x33] %v416
        %421 = vst [vmem:[#allocation2 + $0x20] sm:$0x3] %v417
        %v422 = vld [vmem:[%s248] sm:$0xff]
        %v424 = vcombine.low %v422, %v422
        %v426 = vunpack.c.l.s4 1983009808
        %v427 = vunpack.c.0.s8 %v426
        %v428 = vlaneseq
        %v429 = vshrl.u32 %v428, 7
        %v430 = vsub.s32 %v427, %v429
        %v431 = vrot.slane %v424, %v430
        %v433 = vunpack.c.l.s4 1983009808
        %v434 = vunpack.c.0.s8 %v433
        %v435 = vlaneseq
        %v436 = vshrl.u32 %v435, 7
        %v437 = vsub.s32 %v434, %v436
        %v438 = vrot.slane %v422, %v437
        %439 = vrot.lane.b32.xlu0 %v431, 108
        %v440 = vpop.permute.xlu0 %439
        %441 = vrot.lane.b32.xlu0 %v438, 108
        %v442 = vpop.permute.xlu0 %441
        %v443 = vrot.slane %v440, 4
        %v444 = vrot.slane %v442, 4
        %v445 = vsel %vm320, %v443, %v444
        %vm446 = vcmask 883712
        %v447 = vsel %vm446, %v440, %v445
        %v448 = vsel %vm446, %v442, %v444
        %451 = vst [vmem:[#allocation2 + $0x18] sm:$0xcc] %v447
        %452 = vst [vmem:[#allocation2 + $0x20] sm:$0xc] %v448
        %v453 = vld [vmem:[%s248] sm:$0xff]
        %v455 = vcombine.high %v453, %v453
        %v457 = vunpack.c.l.s4 1983009808
        %v458 = vunpack.c.0.s8 %v457
        %v459 = vlaneseq
        %v460 = vshrl.u32 %v459, 7
        %v461 = vsub.s32 %v458, %v460
        %v462 = vrot.slane %v453, %v461
        %v464 = vunpack.c.l.s4 1983009808
        %v465 = vunpack.c.0.s8 %v464
        %v466 = vlaneseq
        %v467 = vshrl.u32 %v466, 7
        %v468 = vsub.s32 %v465, %v467
        %v469 = vrot.slane %v455, %v468
        %470 = vrot.lane.b32.xlu0 %v462, 92
        %v471 = vpop.permute.xlu0 %470
        %472 = vrot.lane.b32.xlu0 %v469, 92
        %v473 = vpop.permute.xlu0 %472
        %v474 = vrot.slane %v471, 4
        %v475 = vrot.slane %v473, 4
        %v476 = vsel %vm320, %v474, %v475
        %vm477 = vcmask 752640
        %v478 = vsel %vm477, %v471, %v476
        %v479 = vsel %vm477, %v473, %v475
        %482 = vst [vmem:[#allocation2 + $0x24] sm:$0x33] %v478
        %483 = vst [vmem:[#allocation2 + $0x2c] sm:$0x3] %v479
        %v484 = vld [vmem:[%s248] sm:$0xff]
        %v486 = vcombine.low %v484, %v484
        %v488 = vunpack.c.l.s4 1983009808
        %v489 = vunpack.c.0.s8 %v488
        %v490 = vlaneseq
        %v491 = vshrl.u32 %v490, 7
        %v492 = vsub.s32 %v489, %v491
        %v493 = vrot.slane %v486, %v492
        %v495 = vunpack.c.l.s4 1983009808
        %v496 = vunpack.c.0.s8 %v495
        %v497 = vlaneseq
        %v498 = vshrl.u32 %v497, 7
        %v499 = vsub.s32 %v496, %v498
        %v500 = vrot.slane %v484, %v499
        %501 = vrot.lane.b32.xlu0 %v493, 91
        %v502 = vpop.permute.xlu0 %501
        %503 = vrot.lane.b32.xlu0 %v500, 91
        %v504 = vpop.permute.xlu0 %503
        %v505 = vrot.slane %v502, 4
        %v506 = vrot.slane %v504, 4
        %v507 = vsel %vm320, %v505, %v506
        %vm508 = vcmask 744448
        %v509 = vsel %vm508, %v502, %v507
        %v510 = vsel %vm508, %v504, %v506
        %513 = vst [vmem:[#allocation2 + $0x24] sm:$0xcc] %v509
        %514 = vst [vmem:[#allocation2 + $0x2c] sm:$0xc] %v510
        %v515 = vld [vmem:[%s248] sm:$0xff]
        %v517 = vcombine.high %v515, %v515
        %v519 = vunpack.c.l.s4 1983009808
        %v520 = vunpack.c.0.s8 %v519
        %v521 = vlaneseq
        %v522 = vshrl.u32 %v521, 7
        %v523 = vsub.s32 %v520, %v522
        %v524 = vrot.slane %v515, %v523
        %v526 = vunpack.c.l.s4 1983009808
        %v527 = vunpack.c.0.s8 %v526
        %v528 = vlaneseq
        %v529 = vshrl.u32 %v528, 7
        %v530 = vsub.s32 %v527, %v529
        %v531 = vrot.slane %v517, %v530
        %532 = vrot.lane.b32.xlu0 %v524, 90
        %v533 = vpop.permute.xlu0 %532
        %534 = vrot.lane.b32.xlu0 %v531, 90
        %v535 = vpop.permute.xlu0 %534
        %v536 = vrot.slane %v533, 4
        %v537 = vrot.slane %v535, 4
        %v538 = vsel %vm320, %v536, %v537
        %vm539 = vcmask 736256
        %v540 = vsel %vm539, %v533, %v538
        %v541 = vsel %vm539, %v535, %v537
        %544 = vst [vmem:[#allocation2 + $0x30] sm:$0x33] %v540
        %545 = vst [vmem:[#allocation2 + $0x38] sm:$0x3] %v541
      $region40: #{resnet_block_forward.2} parent=35 // pred_fallthru
        _
      %v546 = vld [vmem:[%s252] sm:$0x3]
      %v547 = vld [vmem:[#allocation2] sm:$0xff]
      %v548 = vld [vmem:[#allocation2 + $0x8] sm:$0xf]
      %v549 = vld [vmem:[#allocation2 + $0xc] sm:$0xff]
      %v550 = vld [vmem:[#allocation2 + $0x14] sm:$0xf]
      %v551 = vld [vmem:[#allocation2 + $0x18] sm:$0xff]
      %v552 = vld [vmem:[#allocation2 + $0x20] sm:$0xf]
      %v553 = vld [vmem:[#allocation2 + $0x24] sm:$0xff]
      %v554 = vld [vmem:[#allocation2 + $0x2c] sm:$0xf]
      %v555 = vld [vmem:[#allocation2 + $0x30] sm:$0x33]
      %v556 = vld [vmem:[#allocation2 + $0x38] sm:$0x3]
      %v567 = vunpack.c.l.b16 %v547
      %v568 = vunpack.c.h.b16 %v547
      %v569 = vunpack.c.l.b16 %v548
      %v570 = vunpack.c.l.b16 %v549
      %v571 = vunpack.c.h.b16 %v549
      %v572 = vunpack.c.l.b16 %v550
      %v573 = vunpack.c.l.b16 %v551
      %v574 = vunpack.c.h.b16 %v551
      %v575 = vunpack.c.l.b16 %v552
      %v576 = vunpack.c.l.b16 %v553
      %v577 = vunpack.c.h.b16 %v553
      %v578 = vunpack.c.l.b16 %v554
      %v579 = vunpack.c.l.b16 %v555
      %v580 = vunpack.c.h.b16 %v555
      %v581 = vunpack.c.l.b16 %v556
      %v582 = vpack.c.b16 %v570, %v567
      %v583 = vpack.c.b16 %v571, %v568
      %v584 = vpack.c.b16 %v572, %v569
      %v585 = vpack.c.b16 %v576, %v573
      %v586 = vpack.c.b16 %v577, %v574
      %v587 = vpack.c.b16 %v578, %v575
      %v588 = vpack.c.b16 %v579, %v579
      %v589 = vpack.c.b16 %v580, %v580
      %v590 = vpack.c.b16 %v581, %v581
      %vm597 = vcmask 293888
      %v599 = vsel %vm597, %v546, 0
      %vm601 = vcmask 1041408
      %v603 = vsel %vm601, %v588, 0
      %v606 = vsel %vm601, %v589, 0
      %v609 = vsel %vm601, %v590, 0
      %611 = vmatprep.subr.bf16.mxu0 0
      %612 = vmatpush1.bf16.msra.mxu0 0
      %613 = vmatprep.subr.bf16.mxu0 0
      %614 = vmatpush1.bf16.msra.mxu0 0
      %615 = vmatprep.subr.bf16.mxu0 0
      %616 = vmatpush1.bf16.msra.mxu0 0
      %617 = vmatprep.subr.bf16.mxu0 0
      %618 = vmatpush1.bf16.msra.mxu0 0
      %619 = vmatprep.subr.bf16.mxu0 0
      %620 = vmatpush1.bf16.msra.mxu0 0
      %621 = vmatprep.subr.bf16.mxu0 %v606
      %622 = vmatpush1.bf16.msra.mxu0 %v603
      %623 = vmatprep.subr.bf16.mxu0 %v586
      %624 = vmatpush1.bf16.msra.mxu0 %v585
      %625 = vmatprep.subr.bf16.mxu0 %v583
      %626 = vmatpush1.bf16.msra.mxu0 %v582
      %627 = vmatprep.subr.bf16.mxu0 0
      %628 = vmatpush2.bf16.msra.mxu0 0
      %629 = vmatprep.subr.bf16.mxu0 0
      %630 = vmatpush2.bf16.msra.mxu0 0
      %631 = vmatprep.subr.bf16.mxu0 0
      %632 = vmatpush2.bf16.msra.mxu0 0
      %633 = vmatprep.subr.bf16.mxu0 0
      %634 = vmatpush2.bf16.msra.mxu0 0
      %635 = vmatprep.subr.bf16.mxu0 0
      %636 = vmatpush2.bf16.msra.mxu0 0
      %637 = vmatprep.subr.bf16.mxu0 0
      %638 = vmatpush2.bf16.msra.mxu0 0
      %639 = vmatprep.subr.bf16.mxu0 0
      %640 = vmatpush2.bf16.msra.mxu0 0
      %641 = vmatprep.subr.bf16.mxu0 0
      %642 = vmatpush2.bf16.msra.mxu0 0
      %643 = vmatprep.mubr.bf16.mxu0 0
      %644 = vmatmul.mubr.bf16.gmra.mxu0 %v599
      %v645 = vpop.f32.mrf.mxu0
      %v646 = vadd.f32 0.0, %v645
      %v647 = vpop.f32.mrf.mxu0
      %v648 = vadd.f32 0.0, %v647
      %v649 = vpop.f32.mrf.mxu0
      %v650 = vpop.f32.mrf.mxu0
      %651 = vdwg.mxu0
      %652 = vmatprep.subr.bf16.mxu0 0
      %653 = vmatpush1.bf16.msra.mxu0 0
      %654 = vmatprep.subr.bf16.mxu0 0
      %655 = vmatpush1.bf16.msra.mxu0 0
      %656 = vmatprep.subr.bf16.mxu0 0
      %657 = vmatpush1.bf16.msra.mxu0 0
      %658 = vmatprep.subr.bf16.mxu0 0
      %659 = vmatpush1.bf16.msra.mxu0 0
      %660 = vmatprep.subr.bf16.mxu0 0
      %661 = vmatpush1.bf16.msra.mxu0 0
      %662 = vmatprep.subr.bf16.mxu0 0
      %663 = vmatpush1.bf16.msra.mxu0 %v609
      %664 = vmatprep.subr.bf16.mxu0 0
      %665 = vmatpush1.bf16.msra.mxu0 %v587
      %666 = vmatprep.subr.bf16.mxu0 0
      %667 = vmatpush1.bf16.msra.mxu0 %v584
      %668 = vmatprep.subr.bf16.mxu0 0
      %669 = vmatpush2.bf16.msra.mxu0 0
      %670 = vmatprep.subr.bf16.mxu0 0
      %671 = vmatpush2.bf16.msra.mxu0 0
      %672 = vmatprep.subr.bf16.mxu0 0
      %673 = vmatpush2.bf16.msra.mxu0 0
      %674 = vmatprep.subr.bf16.mxu0 0
      %675 = vmatpush2.bf16.msra.mxu0 0
      %676 = vmatprep.subr.bf16.mxu0 0
      %677 = vmatpush2.bf16.msra.mxu0 0
      %678 = vmatprep.subr.bf16.mxu0 0
      %679 = vmatpush2.bf16.msra.mxu0 0
      %680 = vmatprep.subr.bf16.mxu0 0
      %681 = vmatpush2.bf16.msra.mxu0 0
      %682 = vmatprep.subr.bf16.mxu0 0
      %683 = vmatpush2.bf16.msra.mxu0 0
      %684 = vmatprep.mubr.bf16.mxu0 0
      %685 = vmatmul.mubr.bf16.gmra.mxu0 %v599
      %v686 = vpop.f32.mrf.mxu0
      %v687 = vadd.f32 0.0, %v686
      %v688 = vpop.f32.mrf.mxu0
      %v689 = vpop.f32.mrf.mxu0
      %v690 = vpop.f32.mrf.mxu0
      %691 = vdwg.mxu0
      %v692 = vld [vmem:[%s3] sm:$0x7]
      %v694 = vlaneseq
      %v695 = vshrl.u32 %v694, 7
      %v696 = vsub.s32 0, %v695
      %v697 = vrot.slane %v692, %v696
      %v698 = vlaneseq
      %v699 = vshrl.u32 %v698, 7
      %v700 = vsub.s32 1, %v699
      %v701 = vrot.slane %v692, %v700
      %v702 = vlaneseq
      %v703 = vshrl.u32 %v702, 7
      %v704 = vsub.s32 2, %v703
      %v705 = vrot.slane %v692, %v704
      %v709 = vmul.f32 %v646, %v697
      %v710 = vmul.f32 %v648, %v701
      %v711 = vmul.f32 %v687, %v705
      %vm712 = vcmask 1043456
      %v713 = vsel %vm712, %v709, 0.0
      %v714 = vsel %vm712, %v710, 0.0
      %v715 = vadd.f32 %v713, %v714
      %v716 = vsel %vm712, %v711, 0.0
      %v717 = vadd.f32 %v715, %v716
      %718 = vadd.xlane.f32.xlu0 %v717
      %v719 = vpop.xlane.xlu0 %718
      %v720 = vmul.f32 %v719, 0.00390625
      %v721 = vsub.f32 %v646, %v720
      %v722 = vsub.f32 %v648, %v720
      %v723 = vsub.f32 %v687, %v720
      %v724 = vmul.f32 %v721, %v697
      %v725 = vmul.f32 %v722, %v701
      %v726 = vmul.f32 %v723, %v705
      %v727 = vmul.f32 %v724, %v724
      %v728 = vmul.f32 %v725, %v725
      %v729 = vmul.f32 %v726, %v726
      %v730 = vsel %vm712, %v727, 0.0
      %v731 = vsel %vm712, %v728, 0.0
      %v732 = vadd.f32 %v730, %v731
      %v733 = vsel %vm712, %v729, 0.0
      %v734 = vadd.f32 %v732, %v733
      %735 = vadd.xlane.f32.xlu0 %v734
      %v736 = vpop.xlane.xlu0 %735
      %v737 = vmul.f32 %v736, 0.00390625
      %v738 = vadd.f32 %v737, 1e-05
      %v739 = vrsqrt.pop %v738
      %v740 = vmul.f32 %v721, %v739
      %v741 = vmul.f32 %v722, %v739
      %v742 = vmul.f32 %v723, %v739
      %v743 = vld [vmem:[%s261] sm:$0xff]
      %v744 = vld [vmem:[%s261 + $0x8] sm:$0xf]
      %v747 = vcombine.low %v740, %v741
      %v749 = vadd.f32 %v743, %v747
      %v750 = vadd.f32 %v744, %v742
      %751 = vst [vmem:[%s270] sm:$0xff] %v749
      %752 = vst [vmem:[%s270 + $0x8] sm:$0xf] %v750
      %p753 = scmp.lt.s32.totalorder %s19, 1
      %s754 = scalar_select %p753, %s19, 1
      %p755 = scmp.lt.s32.totalorder %s20, 0
      %s756 = scalar_select %p755, %s20, 0
      %s757 = smul.addr %s756, 3
      %s758 = smul.addr %s754, 3
      %s759 = sadd.s32 %s757, %s758
      %s760 = smul.addr %s759, 4
      %s761 = scalar_lea.vmem %s4, %s760
      // Predicated region
      $region41: #{resnet_block_forward.2} parent=35 // pred_check
        %p762 = pneg %p148
      $region42: #{resnet_block_forward.2} parent=35 // pred_check_branch
        %764 = sbr.rel (%p762) target = $region44
      $region43: #{resnet_block_forward.2} parent=35 // pred_region
        _
      $region44: #{resnet_block_forward.2} parent=35 // pred_fallthru
        _
    $region36: #{resnet_block_forward.2} parent=5 // pred_fallthru
      _
    %p765 = scmp.le.s32.totalorder 2, %s10
    // Predicated region
    $region45: #{resnet_block_forward.2} parent=5 // pred_check
      %p766 = pneg %p765
    $region46: #{resnet_block_forward.2} parent=5 // pred_check_branch
      %768 = sbr.rel (%p766) target = $region48
    $region47: #{resnet_block_forward.2} parent=5 // pred_region
      %s769 = ssub.s32 %s10, 2
      // Predicated region
      $region49: #{resnet_block_forward.2} parent=47 // pred_check
        %p770 = pneg %p154
      $region50: #{resnet_block_forward.2} parent=47 // pred_check_branch
        %772 = sbr.rel (%p770) target = $region52
      $region51: #{resnet_block_forward.2} parent=47 // pred_region
        %p773 = scmp.lt.s32.totalorder %s21, 1
        %s774 = scalar_select %p773, %s21, 1
        %p775 = scmp.lt.s32.totalorder %s22, 0
        %s776 = scalar_select %p775, %s22, 0
        %s777 = smul.addr %s776, 3
        %s778 = smul.addr %s774, 3
        %s779 = sadd.s32 %s777, %s778
        %s780 = smul.addr %s779, 4
        %s781 = scalar_lea.vmem %s4, %s780
      $region52: #{resnet_block_forward.2} parent=47 // pred_fallthru
        _
    $region48: #{resnet_block_forward.2} parent=5 // pred_fallthru
      _
  $region6: #{resnet_block_forward.2} parent=0 // loop_footer
    %s14 = sadd.s32 1, %s10
  $region7: #{resnet_block_forward.2} parent=0 // loop_footer_branch
    %9 = sbr.rel target = $region3
  $region8: #{resnet_block_forward.2} parent=0 // loop_exit
    _

</llo_original>
